<compile_context>
chip_gen: v7x
topology: tpu7x:2x2x1
jax: 0.10.0
libtpu: 0.0.40
codegen_flags: <defaults>
</compile_context>

<pallas_src>
import jax
import jax.numpy as jnp
from jax.experimental import pallas as pl
from jax.experimental.pallas import tpu as pltpu

F_IN = 11 * 61       # 671 (ragged contraction dim for fc1; Mosaic masks the fringe)
H1 = 128
H2 = 128
H3 = 64
H3_PAD = 128         # fc3 output / fc4 K padded to a full lane tile
N_OUT = 3
N_OUT_PAD = 8        # small padded output width: 16x less writeback than 128 lanes


def _round_up(n, m):
    return ((n + m - 1) // m) * m


def mlp_kernel(x_ref,
               w1_ref, b1_ref,
               w2_ref, b2_ref,
               w3_ref, b3_ref,
               w4_ref, b4_ref,
               o_ref):
    # Fused 4-layer MLP: bf16 matmuls on the MXU with f32 accumulation,
    # bias-add + ReLU on the VPU in f32, re-cast to bf16 between layers.
    x = x_ref[...].astype(jnp.bfloat16)                               # (TB, 671) cast on-chip

    h1 = jnp.dot(x, w1_ref[...], preferred_element_type=jnp.float32) + b1_ref[...]
    h1 = jnp.maximum(h1, 0.0).astype(jnp.bfloat16)                    # (TB, 128)

    h2 = jnp.dot(h1, w2_ref[...], preferred_element_type=jnp.float32) + b2_ref[...]
    h2 = jnp.maximum(h2, 0.0).astype(jnp.bfloat16)                    # (TB, 128)

    h3 = jnp.dot(h2, w3_ref[...], preferred_element_type=jnp.float32) + b3_ref[...]
    h3 = jnp.maximum(h3, 0.0).astype(jnp.bfloat16)                    # (TB, 128), cols 64: == 0

    h4 = jnp.dot(h3, w4_ref[...], preferred_element_type=jnp.float32) + b4_ref[...]
    o_ref[...] = jnp.maximum(h4, 0.0).astype(o_ref.dtype)             # (TB, 8) f32


def prepare_params(params):
    """Cast + pad PyTorch-layout f32 params ((in, out) weights) to kernel layout."""
    (w1, b1), (w2, b2), (w3, b3), (w4, b4) = params

    w1p = w1.astype(jnp.bfloat16)                                     # (671, 128)
    w2p = w2.astype(jnp.bfloat16)                                     # (128, 128)
    # fc3 output (and fc4 K) padded 64 -> 128 with zeros -> h3 lane-dense.
    w3p = jnp.zeros((H2, H3_PAD), jnp.float32).at[:, :H3].set(w3).astype(jnp.bfloat16)
    b3p = jnp.zeros((1, H3_PAD), jnp.float32).at[:, :H3].set(b3)
    # fc4: K padded 64 -> 128 (zero rows), output padded 3 -> 8 (zero cols).
    w4p = jnp.zeros((H3_PAD, N_OUT_PAD), jnp.float32).at[:H3, :N_OUT].set(w4).astype(jnp.bfloat16)
    b4p = jnp.zeros((1, N_OUT_PAD), jnp.float32).at[:, :N_OUT].set(b4)

    return (w1p, b1.astype(jnp.float32),
            w2p, b2.astype(jnp.float32),
            w3p, b3p,
            w4p, b4p)


def mlp_forward(x, params, *, tb=2048):
    """x: (B, 11, 61) float32 -> (B, 3) float32."""
    B = x.shape[0]
    w1p, b1, w2p, b2, w3p, b3p, w4p, b4p = prepare_params(params)

    # Flatten only (free reshape of contiguous dims). No wrapper pad/cast pass:
    # the kernel reads raw f32 (B, 671) straight from HBM.
    x2d = x.reshape(B, F_IN).astype(jnp.float32)

    # Batch tiling: big tiles to amortize per-grid-step overhead, but keep
    # >= 2 grid steps whenever that leaves >= 1024 rows/step so v7x's two
    # TensorCores both get work ("parallel" axis). Pad batch rows to a tile
    # multiple with zeros (discarded by the final slice).
    B8 = _round_up(B, 8)
    TB = min(tb, B8)
    half = _round_up(B8 // 2, 8)
    if half >= 1024:
        TB = min(TB, half)
    Bp = _round_up(B, TB)
    if Bp != B:
        x2d = jnp.pad(x2d, ((0, Bp - B), (0, 0)))

    grid = (Bp // TB,)

    # Weights/biases: full-array blocks with constant index_map -> stay
    # VMEM-resident across all grid steps (no re-DMA).
    def resident(shape):
        return pl.BlockSpec(shape, lambda i, _s=shape: tuple(0 for _ in _s))

    out = pl.pallas_call(
        mlp_kernel,
        out_shape=jax.ShapeDtypeStruct((Bp, N_OUT_PAD), jnp.float32),
        grid=grid,
        in_specs=[
            # x: (TB, 671); last dim equals the full array dim so the ragged
            # width is legal.  If a profile shows exposed DMA at step
            # boundaries, add pipeline_mode=pl.Buffered(3) here.
            pl.BlockSpec((TB, F_IN), lambda i: (i, 0)),
            resident(w1p.shape), resident(b1.shape),
            resident(w2p.shape), resident(b2.shape),
            resident(w3p.shape), resident(b3p.shape),
            resident(w4p.shape), resident(b4p.shape),
        ],
        out_specs=pl.BlockSpec((TB, N_OUT_PAD), lambda i: (i, 0)),
        compiler_params=pltpu.CompilerParams(
            dimension_semantics=("parallel",),
            vmem_limit_bytes=32 * 1024 * 1024,
        ),
    )(x2d, w1p, b1, w2p, b2, w3p, b3p, w4p, b4p)

    return out[:B, :N_OUT]


def init_params(key):
    """Deterministic init matching nn.Linear shapes (stored as (in, out))."""
    dims = [(F_IN, H1), (H1, H2), (H2, H3), (H3, N_OUT)]
    params = []
    for fan_in, fan_out in dims:
        kw, kb, key = jax.random.split(key, 3)
        bound = 1.0 / jnp.sqrt(fan_in)
        w = jax.random.uniform(kw, (fan_in, fan_out), jnp.float32, -bound, bound)
        b = jax.random.uniform(kb, (1, fan_out), jnp.float32, -bound, bound)
        params.append((w, b))
    return params


def mlp_ref(x, params):
    """Plain-JAX reference matching the kernel's precision (bf16 matmul, f32 acc)."""
    h = x.reshape(x.shape[0], -1)
    for w, b in params:
        h = jnp.dot(h.astype(jnp.bfloat16), w.astype(jnp.bfloat16),
                    preferred_element_type=jnp.float32) + b
        h = jnp.maximum(h, 0.0)
    return h


if __name__ == "__main__":
    key = jax.random.PRNGKey(0)
    kx, kp = jax.random.split(key)

    B = 2
    x = jax.random.normal(kx, (B, 11, 61), dtype=jnp.float32)
    params = init_params(kp)

    out = mlp_forward(x, params)
    out = jax.block_until_ready(out)

    ref = mlp_ref(x, params)
    assert out.shape == (B, N_OUT), out.shape
    assert jnp.allclose(out, ref, atol=2e-3, rtol=2e-3), "mismatch vs reference"

    print("KERNEL_OK")
</pallas_src>

<mosaic_0001>
module attributes {stable_mosaic.version = 11 : i64} {
  func.func @mlp_kernel(%arg0: i32, %arg1: memref<8x671xf32, #tpu.memory_space<vmem>>, %arg2: memref<671x128xbf16, #tpu.memory_space<vmem>>, %arg3: memref<1x128xf32, #tpu.memory_space<vmem>>, %arg4: memref<128x128xbf16, #tpu.memory_space<vmem>>, %arg5: memref<1x128xf32, #tpu.memory_space<vmem>>, %arg6: memref<128x128xbf16, #tpu.memory_space<vmem>>, %arg7: memref<1x128xf32, #tpu.memory_space<vmem>>, %arg8: memref<128x8xbf16, #tpu.memory_space<vmem>>, %arg9: memref<1x8xf32, #tpu.memory_space<vmem>>, %arg10: memref<8x8xf32, #tpu.memory_space<vmem>>) attributes {dimension_semantics = [#tpu.dimension_semantics<parallel>], iteration_bounds = array<i64: 1>, scalar_prefetch = 0 : i64, scratch_operands = 0 : i64, tpu.core_type = #tpu.core_type<tc>, window_params = [{transform_indices = @transform_0, window_bounds = array<i64: 8, 671>}, {pipeline_mode = #tpu.pipeline_mode<synchronous>, transform_indices = @transform_1, window_bounds = array<i64: 671, 128>}, {pipeline_mode = #tpu.pipeline_mode<synchronous>, transform_indices = @transform_2, window_bounds = array<i64: 1, 128>}, {pipeline_mode = #tpu.pipeline_mode<synchronous>, transform_indices = @transform_3, window_bounds = array<i64: 128, 128>}, {pipeline_mode = #tpu.pipeline_mode<synchronous>, transform_indices = @transform_4, window_bounds = array<i64: 1, 128>}, {pipeline_mode = #tpu.pipeline_mode<synchronous>, transform_indices = @transform_5, window_bounds = array<i64: 128, 128>}, {pipeline_mode = #tpu.pipeline_mode<synchronous>, transform_indices = @transform_6, window_bounds = array<i64: 1, 128>}, {pipeline_mode = #tpu.pipeline_mode<synchronous>, transform_indices = @transform_7, window_bounds = array<i64: 128, 8>}, {pipeline_mode = #tpu.pipeline_mode<synchronous>, transform_indices = @transform_8, window_bounds = array<i64: 1, 8>}, {transform_indices = @transform_9, window_bounds = array<i64: 8, 8>}]} {
    %c0 = arith.constant 0 : index
    %c0_0 = arith.constant 0 : index
    %0 = vector.load %arg1[%c0, %c0_0] : memref<8x671xf32, #tpu.memory_space<vmem>>, vector<8x671xf32>
    %1 = arith.truncf %0 : vector<8x671xf32> to vector<8x671xbf16>
    %c0_1 = arith.constant 0 : index
    %c0_2 = arith.constant 0 : index
    %2 = vector.load %arg2[%c0_1, %c0_2] : memref<671x128xbf16, #tpu.memory_space<vmem>>, vector<671x128xbf16>
    %cst = arith.constant dense<0.000000e+00> : vector<8x128xf32>
    %3 = tpu.matmul %1, %2, %cst {dimension_numbers = #tpu.dot_dimension_numbers<[1], [0], [0], [1], [0, 0, 1, 1], [], []>} : vector<8x671xbf16>, vector<671x128xbf16>, vector<8x128xf32> -> vector<8x128xf32>
    %c0_3 = arith.constant 0 : index
    %c0_4 = arith.constant 0 : index
    %4 = vector.load %arg3[%c0_3, %c0_4] : memref<1x128xf32, #tpu.memory_space<vmem>>, vector<1x128xf32>
    %5 = vector.broadcast %4 : vector<1x128xf32> to vector<8x128xf32>
    %6 = arith.addf %3, %5 : vector<8x128xf32>
    %cst_5 = arith.constant 0.000000e+00 : f32
    %7 = vector.broadcast %cst_5 : f32 to vector<8x128xf32>
    %8 = arith.maximumf %6, %7 : vector<8x128xf32>
    %9 = arith.truncf %8 : vector<8x128xf32> to vector<8x128xbf16>
    %c0_6 = arith.constant 0 : index
    %c0_7 = arith.constant 0 : index
    %10 = vector.load %arg4[%c0_6, %c0_7] : memref<128x128xbf16, #tpu.memory_space<vmem>>, vector<128x128xbf16>
    %cst_8 = arith.constant dense<0.000000e+00> : vector<8x128xf32>
    %11 = tpu.matmul %9, %10, %cst_8 {dimension_numbers = #tpu.dot_dimension_numbers<[1], [0], [0], [1], [0, 0, 1, 1], [], []>} : vector<8x128xbf16>, vector<128x128xbf16>, vector<8x128xf32> -> vector<8x128xf32>
    %c0_9 = arith.constant 0 : index
    %c0_10 = arith.constant 0 : index
    %12 = vector.load %arg5[%c0_9, %c0_10] : memref<1x128xf32, #tpu.memory_space<vmem>>, vector<1x128xf32>
    %13 = vector.broadcast %12 : vector<1x128xf32> to vector<8x128xf32>
    %14 = arith.addf %11, %13 : vector<8x128xf32>
    %cst_11 = arith.constant 0.000000e+00 : f32
    %15 = vector.broadcast %cst_11 : f32 to vector<8x128xf32>
    %16 = arith.maximumf %14, %15 : vector<8x128xf32>
    %17 = arith.truncf %16 : vector<8x128xf32> to vector<8x128xbf16>
    %c0_12 = arith.constant 0 : index
    %c0_13 = arith.constant 0 : index
    %18 = vector.load %arg6[%c0_12, %c0_13] : memref<128x128xbf16, #tpu.memory_space<vmem>>, vector<128x128xbf16>
    %cst_14 = arith.constant dense<0.000000e+00> : vector<8x128xf32>
    %19 = tpu.matmul %17, %18, %cst_14 {dimension_numbers = #tpu.dot_dimension_numbers<[1], [0], [0], [1], [0, 0, 1, 1], [], []>} : vector<8x128xbf16>, vector<128x128xbf16>, vector<8x128xf32> -> vector<8x128xf32>
    %c0_15 = arith.constant 0 : index
    %c0_16 = arith.constant 0 : index
    %20 = vector.load %arg7[%c0_15, %c0_16] : memref<1x128xf32, #tpu.memory_space<vmem>>, vector<1x128xf32>
    %21 = vector.broadcast %20 : vector<1x128xf32> to vector<8x128xf32>
    %22 = arith.addf %19, %21 : vector<8x128xf32>
    %cst_17 = arith.constant 0.000000e+00 : f32
    %23 = vector.broadcast %cst_17 : f32 to vector<8x128xf32>
    %24 = arith.maximumf %22, %23 : vector<8x128xf32>
    %25 = arith.truncf %24 : vector<8x128xf32> to vector<8x128xbf16>
    %c0_18 = arith.constant 0 : index
    %c0_19 = arith.constant 0 : index
    %26 = vector.load %arg8[%c0_18, %c0_19] : memref<128x8xbf16, #tpu.memory_space<vmem>>, vector<128x8xbf16>
    %cst_20 = arith.constant dense<0.000000e+00> : vector<8x8xf32>
    %27 = tpu.matmul %25, %26, %cst_20 {dimension_numbers = #tpu.dot_dimension_numbers<[1], [0], [0], [1], [0, 0, 1, 1], [], []>} : vector<8x128xbf16>, vector<128x8xbf16>, vector<8x8xf32> -> vector<8x8xf32>
    %c0_21 = arith.constant 0 : index
    %c0_22 = arith.constant 0 : index
    %28 = vector.load %arg9[%c0_21, %c0_22] : memref<1x8xf32, #tpu.memory_space<vmem>>, vector<1x8xf32>
    %29 = vector.broadcast %28 : vector<1x8xf32> to vector<8x8xf32>
    %30 = arith.addf %27, %29 : vector<8x8xf32>
    %cst_23 = arith.constant 0.000000e+00 : f32
    %31 = vector.broadcast %cst_23 : f32 to vector<8x8xf32>
    %32 = arith.maximumf %30, %31 : vector<8x8xf32>
    %c0_24 = arith.constant 0 : index
    %c0_25 = arith.constant 0 : index
    %33 = vector.load %arg10[%c0_24, %c0_25] : memref<8x8xf32, #tpu.memory_space<vmem>>, vector<8x8xf32>
    tpu.vector_store %arg10[%c0_24, %c0_25], %32 {strides = array<i32>} : memref<8x8xf32, #tpu.memory_space<vmem>>, vector<8x8xf32>,
    return
  }
  func.func @transform_0(%arg0: i32) -> (i32, i32) {
    %c0_i32 = arith.constant 0 : i32
    %c0_i32_0 = arith.constant 0 : i32
    return %arg0, %c0_i32 : i32, i32
  }
  func.func @transform_1(%arg0: i32) -> (i32, i32) {
    %c0_i32 = arith.constant 0 : i32
    %c0_i32_0 = arith.constant 0 : i32
    %c0_i32_1 = arith.constant 0 : i32
    return %c0_i32, %c0_i32_0 : i32, i32
  }
  func.func @transform_2(%arg0: i32) -> (i32, i32) {
    %c0_i32 = arith.constant 0 : i32
    %c0_i32_0 = arith.constant 0 : i32
    %c0_i32_1 = arith.constant 0 : i32
    return %c0_i32, %c0_i32_0 : i32, i32
  }
  func.func @transform_3(%arg0: i32) -> (i32, i32) {
    %c0_i32 = arith.constant 0 : i32
    %c0_i32_0 = arith.constant 0 : i32
    %c0_i32_1 = arith.constant 0 : i32
    return %c0_i32, %c0_i32_0 : i32, i32
  }
  func.func @transform_4(%arg0: i32) -> (i32, i32) {
    %c0_i32 = arith.constant 0 : i32
    %c0_i32_0 = arith.constant 0 : i32
    %c0_i32_1 = arith.constant 0 : i32
    return %c0_i32, %c0_i32_0 : i32, i32
  }
  func.func @transform_5(%arg0: i32) -> (i32, i32) {
    %c0_i32 = arith.constant 0 : i32
    %c0_i32_0 = arith.constant 0 : i32
    %c0_i32_1 = arith.constant 0 : i32
    return %c0_i32, %c0_i32_0 : i32, i32
  }
  func.func @transform_6(%arg0: i32) -> (i32, i32) {
    %c0_i32 = arith.constant 0 : i32
    %c0_i32_0 = arith.constant 0 : i32
    %c0_i32_1 = arith.constant 0 : i32
    return %c0_i32, %c0_i32_0 : i32, i32
  }
  func.func @transform_7(%arg0: i32) -> (i32, i32) {
    %c0_i32 = arith.constant 0 : i32
    %c0_i32_0 = arith.constant 0 : i32
    %c0_i32_1 = arith.constant 0 : i32
    return %c0_i32, %c0_i32_0 : i32, i32
  }
  func.func @transform_8(%arg0: i32) -> (i32, i32) {
    %c0_i32 = arith.constant 0 : i32
    %c0_i32_0 = arith.constant 0 : i32
    %c0_i32_1 = arith.constant 0 : i32
    return %c0_i32, %c0_i32_0 : i32, i32
  }
  func.func @transform_9(%arg0: i32) -> (i32, i32) {
    %c0_i32 = arith.constant 0 : i32
    %c0_i32_0 = arith.constant 0 : i32
    return %arg0, %c0_i32 : i32, i32
  }
}

</mosaic_0001>

<llo_original>
// kernel: tpu_custom_call.1
$region0: #{tpu_custom_call.1}
  #allocation0 [shape = 'u32[]', space=smem, size = 0x4, offset = 0x4, fixed_abs, tag = 'smem constant byte address 0x4 - core index']
  #allocation1 [shape = 'u32[144,128]{1,0:T(1,128)}', space=vmem, size = 0x12000, scoped, tag = 'internal scratch']
  %s0 = inlined_call_operand.hbm [shape: f32[8,671], index: 0, kind: input, shape index: {}]
  %s1 = inlined_call_operand.hbm [shape: bf16[671,128], index: 1, kind: input, shape index: {}]
  %s2 = inlined_call_operand.vmem [shape: f32[1,128], index: 2, kind: input, shape index: {}]
  %s3 = inlined_call_operand.vmem [shape: bf16[128,128], index: 3, kind: input, shape index: {}]
  %s4 = inlined_call_operand.vmem [shape: f32[1,128], index: 4, kind: input, shape index: {}]
  %s5 = inlined_call_operand.hbm [shape: bf16[128,128], index: 5, kind: input, shape index: {}]
  %s6 = inlined_call_operand.vmem [shape: f32[1,128], index: 6, kind: input, shape index: {}]
  %s7 = inlined_call_operand.vmem [shape: bf16[128,8], index: 7, kind: input, shape index: {}]
  %s8 = inlined_call_operand.vmem [shape: f32[1,8], index: 8, kind: input, shape index: {}]
  %s9 = inlined_call_operand.hbm [shape: f32[8,8], index: 9, kind: output, shape index: {}]
  %s10 = sld [smem:[#allocation0]]
  $region58: #{tpu_custom_call.1} parent=0
    _
  %s12 = ssub.s32 1, %s10
  %s13 = scalar_select 0, %s12, %s10
  $region1: #{tpu_custom_call.1} parent=0
    #allocation2 [shape = 'u8[24576]{0}', space=vmem, size = 0x6000, scoped, tag = 'input window, operand 0, single buffered']
    #allocation3 [shape = 's32[1]{0}', space=sflag, size = 0x4, scoped, tag = 'scoped memory for tpu_custom_call.1']
    #allocation4 [shape = 's32[1]{0}', space=sflag, size = 0x4, scoped, tag = 'scoped memory for tpu_custom_call.1']
    #allocation5 [shape = 'u8[172032]{0}', space=vmem, size = 0x2a000, scoped, tag = 'input window, operand 1, single buffered']
    #allocation6 [shape = 's32[1]{0}', space=sflag, size = 0x4, scoped, tag = 'scoped memory for tpu_custom_call.1']
    #allocation7 [shape = 'u8[32768]{0}', space=vmem, size = 0x8000, scoped, tag = 'input window, operand 5, single buffered']
    #allocation8 [shape = 'u8[4096]{0}', space=vmem, size = 0x1000, scoped, tag = 'output window, operand 0, single buffered']
    %14 = vsyncpa [#allocation3], 0
    %15 = vsyncpa [#allocation6], 0
    %16 = vsyncpa [#allocation4], 0
    // Predicated region
    $region2: #{tpu_custom_call.1} parent=1 // pred_check
      _
    $region3: #{tpu_custom_call.1} parent=1 // pred_check_branch
      %18 = sbr.rel (0) target = $region5
    $region4: #{tpu_custom_call.1} parent=1 // pred_region
      %s20 = ssub.s32 768, 768
      %21 = vsyncadd [#allocation3], %s20
      %s23 = sshll.u32 [#allocation2], 4
      %s24 = int_to_ptr.vmem [resolvable:$true] %s23
      %26 = dma.hbm_to_vmem [thread:$0]  %s0, 768, %s24, [#allocation3]
    $region5: #{tpu_custom_call.1} parent=1 // pred_fallthru
      _
    // Predicated region
    $region6: #{tpu_custom_call.1} parent=1 // pred_check
      _
    $region7: #{tpu_custom_call.1} parent=1 // pred_check_branch
      %28 = sbr.rel (0) target = $region9
    $region8: #{tpu_custom_call.1} parent=1 // pred_region
      %s30 = ssub.s32 5376, 5376
      %31 = vsyncadd [#allocation6], %s30
      %s32 = sshll.u32 [#allocation5], 4
      %s33 = int_to_ptr.vmem [resolvable:$true] %s32
      %38 = dma.hbm_to_vmem [thread:$0]  %s1, 5376, %s33, [#allocation6], 64, 64, 4
    $region9: #{tpu_custom_call.1} parent=1 // pred_fallthru
      _
    // Predicated region
    $region10: #{tpu_custom_call.1} parent=1 // pred_check
      _
    $region11: #{tpu_custom_call.1} parent=1 // pred_check_branch
      %40 = sbr.rel (0) target = $region13
    $region12: #{tpu_custom_call.1} parent=1 // pred_region
      _
    $region13: #{tpu_custom_call.1} parent=1 // pred_fallthru
      _
    // Predicated region
    $region14: #{tpu_custom_call.1} parent=1 // pred_check
      _
    $region15: #{tpu_custom_call.1} parent=1 // pred_check_branch
      %42 = sbr.rel (0) target = $region17
    $region16: #{tpu_custom_call.1} parent=1 // pred_region
      _
    $region17: #{tpu_custom_call.1} parent=1 // pred_fallthru
      _
    // Predicated region
    $region18: #{tpu_custom_call.1} parent=1 // pred_check
      _
    $region19: #{tpu_custom_call.1} parent=1 // pred_check_branch
      %44 = sbr.rel (0) target = $region21
    $region20: #{tpu_custom_call.1} parent=1 // pred_region
      _
    $region21: #{tpu_custom_call.1} parent=1 // pred_fallthru
      _
    // Predicated region
    $region22: #{tpu_custom_call.1} parent=1 // pred_check
      _
    $region23: #{tpu_custom_call.1} parent=1 // pred_check_branch
      %46 = sbr.rel (0) target = $region25
    $region24: #{tpu_custom_call.1} parent=1 // pred_region
      %s48 = ssub.s32 1024, 1024
      %49 = vsyncadd [#allocation6], %s48
      %s50 = sshll.u32 [#allocation7], 4
      %s51 = int_to_ptr.vmem [resolvable:$true] %s50
      %56 = dma.hbm_to_vmem [thread:$0]  %s5, 1024, %s51, [#allocation6], 64, 64, 4
    $region25: #{tpu_custom_call.1} parent=1 // pred_fallthru
      _
    // Predicated region
    $region26: #{tpu_custom_call.1} parent=1 // pred_check
      _
    $region27: #{tpu_custom_call.1} parent=1 // pred_check_branch
      %58 = sbr.rel (0) target = $region29
    $region28: #{tpu_custom_call.1} parent=1 // pred_region
      _
    $region29: #{tpu_custom_call.1} parent=1 // pred_fallthru
      _
    // Predicated region
    $region30: #{tpu_custom_call.1} parent=1 // pred_check
      _
    $region31: #{tpu_custom_call.1} parent=1 // pred_check_branch
      %60 = sbr.rel (0) target = $region33
    $region32: #{tpu_custom_call.1} parent=1 // pred_region
      _
    $region33: #{tpu_custom_call.1} parent=1 // pred_fallthru
      _
    // Predicated region
    $region34: #{tpu_custom_call.1} parent=1 // pred_check
      _
    $region35: #{tpu_custom_call.1} parent=1 // pred_check_branch
      %62 = sbr.rel (0) target = $region37
    $region36: #{tpu_custom_call.1} parent=1 // pred_region
      _
    $region37: #{tpu_custom_call.1} parent=1 // pred_fallthru
      _
    // Predicated region
    $region38: #{tpu_custom_call.1} parent=1 // pred_check
      _
    $region39: #{tpu_custom_call.1} parent=1 // pred_check_branch
      %64 = sbr.rel (0) target = $region41
    $region40: #{tpu_custom_call.1} parent=1 // pred_region
      %65 = dma.done [#allocation3], 768
    $region41: #{tpu_custom_call.1} parent=1 // pred_fallthru
      _
    // Predicated region
    $region42: #{tpu_custom_call.1} parent=1 // pred_check
      _
    $region43: #{tpu_custom_call.1} parent=1 // pred_check_branch
      %67 = sbr.rel (0) target = $region45
    $region44: #{tpu_custom_call.1} parent=1 // pred_region
      %68 = dma.done [#allocation6], 5376
    $region45: #{tpu_custom_call.1} parent=1 // pred_fallthru
      _
    // Predicated region
    $region46: #{tpu_custom_call.1} parent=1 // pred_check
      _
    $region47: #{tpu_custom_call.1} parent=1 // pred_check_branch
      %70 = sbr.rel (0) target = $region49
    $region48: #{tpu_custom_call.1} parent=1 // pred_region
      %71 = dma.done [#allocation6], 1024
    $region49: #{tpu_custom_call.1} parent=1 // pred_fallthru
      _
    %v73 = vld [vmem:[#allocation2] sm:$0xff]
    %v74 = vld [vmem:[#allocation2 + $0x8] sm:$0xff]
    %v75 = vld [vmem:[#allocation2 + $0x10] sm:$0xff]
    %v76 = vld [vmem:[#allocation2 + $0x18] sm:$0xff]
    %v77 = vld [vmem:[#allocation2 + $0x20] sm:$0xff]
    %v78 = vld [vmem:[#allocation2 + $0x28] sm:$0xff]
    %v79 = vpack.c.bf16 %v73, %v73
    %v80 = vpack.c.bf16 %v74, %v74
    %v81 = vpack.c.bf16 %v75, %v75
    %v82 = vpack.c.bf16 %v76, %v76
    %v83 = vpack.c.bf16 %v77, %v77
    %v84 = vpack.c.bf16 %v78, %v78
    %v85 = vld [vmem:[#allocation5] sm:$0xf]
    %v86 = vld [vmem:[#allocation5 + $0x4] sm:$0xf]
    %v87 = vld [vmem:[#allocation5 + $0x8] sm:$0xf]
    %v88 = vld [vmem:[#allocation5 + $0xc] sm:$0xf]
    %v89 = vld [vmem:[#allocation5 + $0x10] sm:$0xf]
    %v90 = vld [vmem:[#allocation5 + $0x14] sm:$0xf]
    %v91 = vld [vmem:[#allocation5 + $0x18] sm:$0xf]
    %v92 = vld [vmem:[#allocation5 + $0x1c] sm:$0xf]
    %v93 = vld [vmem:[#allocation5 + $0x20] sm:$0xf]
    %v94 = vld [vmem:[#allocation5 + $0x24] sm:$0xf]
    %v95 = vld [vmem:[#allocation5 + $0x28] sm:$0xf]
    %v96 = vld [vmem:[#allocation5 + $0x2c] sm:$0xf]
    %v97 = vld [vmem:[#allocation5 + $0x30] sm:$0xf]
    %v98 = vld [vmem:[#allocation5 + $0x34] sm:$0xf]
    %v99 = vld [vmem:[#allocation5 + $0x38] sm:$0xf]
    %v100 = vld [vmem:[#allocation5 + $0x3c] sm:$0xf]
    %v101 = vld [vmem:[#allocation5 + $0x40] sm:$0xf]
    %v102 = vld [vmem:[#allocation5 + $0x44] sm:$0xf]
    %v103 = vld [vmem:[#allocation5 + $0x48] sm:$0xf]
    %v104 = vld [vmem:[#allocation5 + $0x4c] sm:$0xf]
    %v105 = vld [vmem:[#allocation5 + $0x50] sm:$0xf]
    %v106 = vld [vmem:[#allocation5 + $0x54] sm:$0xf]
    %v107 = vld [vmem:[#allocation5 + $0x58] sm:$0xf]
    %v108 = vld [vmem:[#allocation5 + $0x5c] sm:$0xf]
    %v109 = vld [vmem:[#allocation5 + $0x60] sm:$0xf]
    %v110 = vld [vmem:[#allocation5 + $0x64] sm:$0xf]
    %v111 = vld [vmem:[#allocation5 + $0x68] sm:$0xf]
    %v112 = vld [vmem:[#allocation5 + $0x6c] sm:$0xf]
    %v113 = vld [vmem:[#allocation5 + $0x70] sm:$0xf]
    %v114 = vld [vmem:[#allocation5 + $0x74] sm:$0xf]
    %v115 = vld [vmem:[#allocation5 + $0x78] sm:$0xf]
    %v116 = vld [vmem:[#allocation5 + $0x7c] sm:$0xf]
    %v117 = vld [vmem:[#allocation5 + $0x80] sm:$0xf]
    %v118 = vld [vmem:[#allocation5 + $0x84] sm:$0xf]
    %v119 = vld [vmem:[#allocation5 + $0x88] sm:$0xf]
    %v120 = vld [vmem:[#allocation5 + $0x8c] sm:$0xf]
    %v121 = vld [vmem:[#allocation5 + $0x90] sm:$0xf]
    %v122 = vld [vmem:[#allocation5 + $0x94] sm:$0xf]
    %v123 = vld [vmem:[#allocation5 + $0x98] sm:$0xf]
    %v124 = vld [vmem:[#allocation5 + $0x9c] sm:$0xf]
    %v125 = vld [vmem:[#allocation5 + $0xa0] sm:$0xf]
    %v126 = vld [vmem:[#allocation5 + $0xa4] sm:$0xf]
    %v127 = vld [vmem:[#allocation5 + $0xa8] sm:$0xf]
    %v128 = vld [vmem:[#allocation5 + $0xac] sm:$0xf]
    %v129 = vld [vmem:[#allocation5 + $0xb0] sm:$0xf]
    %v130 = vld [vmem:[#allocation5 + $0xb4] sm:$0xf]
    %v131 = vld [vmem:[#allocation5 + $0xb8] sm:$0xf]
    %v132 = vld [vmem:[#allocation5 + $0xbc] sm:$0xf]
    %v133 = vld [vmem:[#allocation5 + $0xc0] sm:$0xf]
    %v134 = vld [vmem:[#allocation5 + $0xc4] sm:$0xf]
    %v135 = vld [vmem:[#allocation5 + $0xc8] sm:$0xf]
    %v136 = vld [vmem:[#allocation5 + $0xcc] sm:$0xf]
    %v137 = vld [vmem:[#allocation5 + $0xd0] sm:$0xf]
    %v138 = vld [vmem:[#allocation5 + $0xd4] sm:$0xf]
    %v139 = vld [vmem:[#allocation5 + $0xd8] sm:$0xf]
    %v140 = vld [vmem:[#allocation5 + $0xdc] sm:$0xf]
    %v141 = vld [vmem:[#allocation5 + $0xe0] sm:$0xf]
    %v142 = vld [vmem:[#allocation5 + $0xe4] sm:$0xf]
    %v143 = vld [vmem:[#allocation5 + $0xe8] sm:$0xf]
    %v144 = vld [vmem:[#allocation5 + $0xec] sm:$0xf]
    %v145 = vld [vmem:[#allocation5 + $0xf0] sm:$0xf]
    %v146 = vld [vmem:[#allocation5 + $0xf4] sm:$0xf]
    %v147 = vld [vmem:[#allocation5 + $0xf8] sm:$0xf]
    %v148 = vld [vmem:[#allocation5 + $0xfc] sm:$0xf]
    %v149 = vld [vmem:[#allocation5 + $0x100] sm:$0xf]
    %v150 = vld [vmem:[#allocation5 + $0x104] sm:$0xf]
    %v151 = vld [vmem:[#allocation5 + $0x108] sm:$0xf]
    %v152 = vld [vmem:[#allocation5 + $0x10c] sm:$0xf]
    %v153 = vld [vmem:[#allocation5 + $0x110] sm:$0xf]
    %v154 = vld [vmem:[#allocation5 + $0x114] sm:$0xf]
    %v155 = vld [vmem:[#allocation5 + $0x118] sm:$0xf]
    %v156 = vld [vmem:[#allocation5 + $0x11c] sm:$0xf]
    %v157 = vld [vmem:[#allocation5 + $0x120] sm:$0xf]
    %v158 = vld [vmem:[#allocation5 + $0x124] sm:$0xf]
    %v159 = vld [vmem:[#allocation5 + $0x128] sm:$0xf]
    %v160 = vld [vmem:[#allocation5 + $0x12c] sm:$0xf]
    %v161 = vld [vmem:[#allocation5 + $0x130] sm:$0xf]
    %v162 = vld [vmem:[#allocation5 + $0x134] sm:$0xf]
    %v163 = vld [vmem:[#allocation5 + $0x138] sm:$0xf]
    %v164 = vld [vmem:[#allocation5 + $0x13c] sm:$0xf]
    %v165 = vld [vmem:[#allocation5 + $0x140] sm:$0xf]
    %v166 = vld [vmem:[#allocation5 + $0x144] sm:$0xf]
    %v167 = vld [vmem:[#allocation5 + $0x148] sm:$0xf]
    %v168 = vld [vmem:[#allocation5 + $0x14c] sm:$0xf]
    %v169 = vld [vmem:[%s2] sm:$0x1]
    %v171 = vlaneseq
    %v172 = vshrl.u32 %v171, 7
    %v173 = vsub.s32 0, %v172
    %v174 = vrot.slane %v169, %v173
    %v260 = vunpack.c.l.b16 %v85
    %v261 = vunpack.c.l.b16 %v86
    %v262 = vunpack.c.l.b16 %v87
    %v263 = vunpack.c.l.b16 %v88
    %v264 = vunpack.c.l.b16 %v89
    %v265 = vunpack.c.l.b16 %v90
    %v266 = vunpack.c.l.b16 %v91
    %v267 = vunpack.c.l.b16 %v92
    %v268 = vunpack.c.l.b16 %v93
    %v269 = vunpack.c.l.b16 %v94
    %v270 = vunpack.c.l.b16 %v95
    %v271 = vunpack.c.l.b16 %v96
    %v272 = vunpack.c.l.b16 %v97
    %v273 = vunpack.c.l.b16 %v98
    %v274 = vunpack.c.l.b16 %v99
    %v275 = vunpack.c.l.b16 %v100
    %v276 = vunpack.c.l.b16 %v101
    %v277 = vunpack.c.l.b16 %v102
    %v278 = vunpack.c.l.b16 %v103
    %v279 = vunpack.c.l.b16 %v104
    %v280 = vunpack.c.l.b16 %v105
    %v281 = vunpack.c.l.b16 %v106
    %v282 = vunpack.c.l.b16 %v107
    %v283 = vunpack.c.l.b16 %v108
    %v284 = vunpack.c.l.b16 %v109
    %v285 = vunpack.c.l.b16 %v110
    %v286 = vunpack.c.l.b16 %v111
    %v287 = vunpack.c.l.b16 %v112
    %v288 = vunpack.c.l.b16 %v113
    %v289 = vunpack.c.l.b16 %v114
    %v290 = vunpack.c.l.b16 %v115
    %v291 = vunpack.c.l.b16 %v116
    %v292 = vunpack.c.l.b16 %v117
    %v293 = vunpack.c.l.b16 %v118
    %v294 = vunpack.c.l.b16 %v119
    %v295 = vunpack.c.l.b16 %v120
    %v296 = vunpack.c.l.b16 %v121
    %v297 = vunpack.c.l.b16 %v122
    %v298 = vunpack.c.l.b16 %v123
    %v299 = vunpack.c.l.b16 %v124
    %v300 = vunpack.c.l.b16 %v125
    %v301 = vunpack.c.l.b16 %v126
    %v302 = vunpack.c.l.b16 %v127
    %v303 = vunpack.c.l.b16 %v128
    %v304 = vunpack.c.l.b16 %v129
    %v305 = vunpack.c.l.b16 %v130
    %v306 = vunpack.c.l.b16 %v131
    %v307 = vunpack.c.l.b16 %v132
    %v308 = vunpack.c.l.b16 %v133
    %v309 = vunpack.c.l.b16 %v134
    %v310 = vunpack.c.l.b16 %v135
    %v311 = vunpack.c.l.b16 %v136
    %v312 = vunpack.c.l.b16 %v137
    %v313 = vunpack.c.l.b16 %v138
    %v314 = vunpack.c.l.b16 %v139
    %v315 = vunpack.c.l.b16 %v140
    %v316 = vunpack.c.l.b16 %v141
    %v317 = vunpack.c.l.b16 %v142
    %v318 = vunpack.c.l.b16 %v143
    %v319 = vunpack.c.l.b16 %v144
    %v320 = vunpack.c.l.b16 %v145
    %v321 = vunpack.c.l.b16 %v146
    %v322 = vunpack.c.l.b16 %v147
    %v323 = vunpack.c.l.b16 %v148
    %v324 = vunpack.c.l.b16 %v149
    %v325 = vunpack.c.l.b16 %v150
    %v326 = vunpack.c.l.b16 %v151
    %v327 = vunpack.c.l.b16 %v152
    %v328 = vunpack.c.l.b16 %v153
    %v329 = vunpack.c.l.b16 %v154
    %v330 = vunpack.c.l.b16 %v155
    %v331 = vunpack.c.l.b16 %v156
    %v332 = vunpack.c.l.b16 %v157
    %v333 = vunpack.c.l.b16 %v158
    %v334 = vunpack.c.l.b16 %v159
    %v335 = vunpack.c.l.b16 %v160
    %v336 = vunpack.c.l.b16 %v161
    %v337 = vunpack.c.l.b16 %v162
    %v338 = vunpack.c.l.b16 %v163
    %v339 = vunpack.c.l.b16 %v164
    %v340 = vunpack.c.l.b16 %v165
    %v341 = vunpack.c.l.b16 %v166
    %v342 = vunpack.c.l.b16 %v167
    %v343 = vunpack.c.l.b16 %v168
    %v344 = vpack.c.b16 %v261, %v260
    %v345 = vpack.c.b16 %v263, %v262
    %v346 = vpack.c.b16 %v265, %v264
    %v347 = vpack.c.b16 %v267, %v266
    %v348 = vpack.c.b16 %v269, %v268
    %v349 = vpack.c.b16 %v271, %v270
    %v350 = vpack.c.b16 %v273, %v272
    %v351 = vpack.c.b16 %v275, %v274
    %v352 = vpack.c.b16 %v277, %v276
    %v353 = vpack.c.b16 %v279, %v278
    %v354 = vpack.c.b16 %v281, %v280
    %v355 = vpack.c.b16 %v283, %v282
    %v356 = vpack.c.b16 %v285, %v284
    %v357 = vpack.c.b16 %v287, %v286
    %v358 = vpack.c.b16 %v289, %v288
    %v359 = vpack.c.b16 %v291, %v290
    %v360 = vpack.c.b16 %v293, %v292
    %v361 = vpack.c.b16 %v295, %v294
    %v362 = vpack.c.b16 %v297, %v296
    %v363 = vpack.c.b16 %v299, %v298
    %v364 = vpack.c.b16 %v301, %v300
    %v365 = vpack.c.b16 %v303, %v302
    %v366 = vpack.c.b16 %v305, %v304
    %v367 = vpack.c.b16 %v307, %v306
    %v368 = vpack.c.b16 %v309, %v308
    %v369 = vpack.c.b16 %v311, %v310
    %v370 = vpack.c.b16 %v313, %v312
    %v371 = vpack.c.b16 %v315, %v314
    %v372 = vpack.c.b16 %v317, %v316
    %v373 = vpack.c.b16 %v319, %v318
    %v374 = vpack.c.b16 %v321, %v320
    %v375 = vpack.c.b16 %v323, %v322
    %v376 = vpack.c.b16 %v325, %v324
    %v377 = vpack.c.b16 %v327, %v326
    %v378 = vpack.c.b16 %v329, %v328
    %v379 = vpack.c.b16 %v331, %v330
    %v380 = vpack.c.b16 %v333, %v332
    %v381 = vpack.c.b16 %v335, %v334
    %v382 = vpack.c.b16 %v337, %v336
    %v383 = vpack.c.b16 %v339, %v338
    %v384 = vpack.c.b16 %v341, %v340
    %v385 = vpack.c.b16 %v343, %v342
    %vm427 = vcmask 252928
    %v429 = vsel %vm427, %v84, 0
    %vm431 = vcmask 1046528
    %vm432 = vcmask 1047552
    %v433 = vsel %vm431, 4294967295, 65535
    %v434 = vsel %vm432, %v433, 0
    %v436 = vand.u32 %v385, %v434
    %438 = vmatprep.subr.bf16.mxu0 0
    %439 = vmatpush1.bf16.msra.mxu0 %v344
    %440 = vmatprep.subr.bf16.mxu0 0
    %441 = vmatpush1.bf16.msra.mxu0 %v345
    %442 = vmatprep.subr.bf16.mxu0 0
    %443 = vmatpush1.bf16.msra.mxu0 %v346
    %444 = vmatprep.subr.bf16.mxu0 0
    %445 = vmatpush1.bf16.msra.mxu0 %v347
    %446 = vmatprep.subr.bf16.mxu0 0
    %447 = vmatpush1.bf16.msra.mxu0 %v348
    %448 = vmatprep.subr.bf16.mxu0 0
    %449 = vmatpush1.bf16.msra.mxu0 %v349
    %450 = vmatprep.subr.bf16.mxu0 0
    %451 = vmatpush1.bf16.msra.mxu0 %v350
    %452 = vmatprep.subr.bf16.mxu0 0
    %453 = vmatpush1.bf16.msra.mxu0 %v351
    %454 = vmatprep.subr.bf16.mxu0 0
    %455 = vmatpush1.bf16.msra.mxu0 %v352
    %456 = vmatprep.subr.bf16.mxu0 0
    %457 = vmatpush1.bf16.msra.mxu0 %v353
    %458 = vmatprep.subr.bf16.mxu0 0
    %459 = vmatpush1.bf16.msra.mxu0 %v354
    %460 = vmatprep.subr.bf16.mxu0 0
    %461 = vmatpush1.bf16.msra.mxu0 %v355
    %462 = vmatprep.subr.bf16.mxu0 0
    %463 = vmatpush1.bf16.msra.mxu0 %v356
    %464 = vmatprep.subr.bf16.mxu0 0
    %465 = vmatpush1.bf16.msra.mxu0 %v357
    %466 = vmatprep.subr.bf16.mxu0 0
    %467 = vmatpush1.bf16.msra.mxu0 %v358
    %468 = vmatprep.subr.bf16.mxu0 0
    %469 = vmatpush1.bf16.msra.mxu0 %v359
    %470 = vmatprep.mubr.bf16.mxu0 %v80
    %471 = vmatmul.mubr.bf16.gmra.mrb[0].mxu0 %v79
    %v472 = vpop.f32.mrb[0].mxu0
    %v473 = vadd.f32 %v174, %v472
    %v474 = vpop.f32.mrb[0].mxu0
    %v475 = vpop.f32.mrb[0].mxu0
    %v476 = vpop.f32.mrb[0].mxu0
    %477 = vdwg.mxu0
    %478 = vmatprep.subr.bf16.mxu0 0
    %479 = vmatpush1.bf16.msra.mxu0 %v360
    %480 = vmatprep.subr.bf16.mxu0 0
    %481 = vmatpush1.bf16.msra.mxu0 %v361
    %482 = vmatprep.subr.bf16.mxu0 0
    %483 = vmatpush1.bf16.msra.mxu0 %v362
    %484 = vmatprep.subr.bf16.mxu0 0
    %485 = vmatpush1.bf16.msra.mxu0 %v363
    %486 = vmatprep.subr.bf16.mxu0 0
    %487 = vmatpush1.bf16.msra.mxu0 %v364
    %488 = vmatprep.subr.bf16.mxu0 0
    %489 = vmatpush1.bf16.msra.mxu0 %v365
    %490 = vmatprep.subr.bf16.mxu0 0
    %491 = vmatpush1.bf16.msra.mxu0 %v366
    %492 = vmatprep.subr.bf16.mxu0 0
    %493 = vmatpush1.bf16.msra.mxu0 %v367
    %494 = vmatprep.subr.bf16.mxu0 0
    %495 = vmatpush1.bf16.msra.mxu0 %v368
    %496 = vmatprep.subr.bf16.mxu0 0
    %497 = vmatpush1.bf16.msra.mxu0 %v369
    %498 = vmatprep.subr.bf16.mxu0 0
    %499 = vmatpush1.bf16.msra.mxu0 %v370
    %500 = vmatprep.subr.bf16.mxu0 0
    %501 = vmatpush1.bf16.msra.mxu0 %v371
    %502 = vmatprep.subr.bf16.mxu0 0
    %503 = vmatpush1.bf16.msra.mxu0 %v372
    %504 = vmatprep.subr.bf16.mxu0 0
    %505 = vmatpush1.bf16.msra.mxu0 %v373
    %506 = vmatprep.subr.bf16.mxu0 0
    %507 = vmatpush1.bf16.msra.mxu0 %v374
    %508 = vmatprep.subr.bf16.mxu0 0
    %509 = vmatpush1.bf16.msra.mxu0 %v375
    %510 = vmatprep.mubr.bf16.mxu0 %v82
    %511 = vmatmul.mubr.bf16.gmra.mrb[0].mxu0 %v81
    %v512 = vpop.f32.mrb[0].mxu0
    %v513 = vadd.f32 %v473, %v512
    %v514 = vpop.f32.mrb[0].mxu0
    %v515 = vpop.f32.mrb[0].mxu0
    %v516 = vpop.f32.mrb[0].mxu0
    %517 = vdwg.mxu0
    %518 = vmatprep.subr.bf16.mxu0 0
    %519 = vmatpush1.bf16.msra.mxu0 %v376
    %520 = vmatprep.subr.bf16.mxu0 0
    %521 = vmatpush1.bf16.msra.mxu0 %v377
    %522 = vmatprep.subr.bf16.mxu0 0
    %523 = vmatpush1.bf16.msra.mxu0 %v378
    %524 = vmatprep.subr.bf16.mxu0 0
    %525 = vmatpush1.bf16.msra.mxu0 %v379
    %526 = vmatprep.subr.bf16.mxu0 0
    %527 = vmatpush1.bf16.msra.mxu0 %v380
    %528 = vmatprep.subr.bf16.mxu0 0
    %529 = vmatpush1.bf16.msra.mxu0 %v381
    %530 = vmatprep.subr.bf16.mxu0 0
    %531 = vmatpush1.bf16.msra.mxu0 %v382
    %532 = vmatprep.subr.bf16.mxu0 0
    %533 = vmatpush1.bf16.msra.mxu0 %v383
    %534 = vmatprep.subr.bf16.mxu0 0
    %535 = vmatpush1.bf16.msra.mxu0 %v384
    %536 = vmatprep.subr.bf16.mxu0 0
    %537 = vmatpush1.bf16.msra.mxu0 %v436
    %538 = vmatprep.subr.bf16.mxu0 0
    %539 = vmatpush1.bf16.msra.mxu0 0
    %540 = vmatprep.subr.bf16.mxu0 0
    %541 = vmatpush1.bf16.msra.mxu0 0
    %542 = vmatprep.subr.bf16.mxu0 0
    %543 = vmatpush1.bf16.msra.mxu0 0
    %544 = vmatprep.subr.bf16.mxu0 0
    %545 = vmatpush1.bf16.msra.mxu0 0
    %546 = vmatprep.subr.bf16.mxu0 0
    %547 = vmatpush1.bf16.msra.mxu0 0
    %548 = vmatprep.subr.bf16.mxu0 0
    %549 = vmatpush1.bf16.msra.mxu0 0
    %550 = vmatprep.mubr.bf16.mxu0 %v429
    %551 = vmatmul.mubr.bf16.gmra.mrb[0].mxu0 %v83
    %v552 = vpop.f32.mrb[0].mxu0
    %v553 = vadd.f32 %v513, %v552
    %v554 = vpop.f32.mrb[0].mxu0
    %v555 = vpop.f32.mrb[0].mxu0
    %v556 = vpop.f32.mrb[0].mxu0
    %557 = vdwg.mxu0
    %v558 = vmax.f32 %v553, 0.0
    %v559 = vpack.c.bf16 %v558, %v558
    %v560 = vld [vmem:[%s3] sm:$0xf]
    %v561 = vld [vmem:[%s3 + $0x4] sm:$0xf]
    %v562 = vld [vmem:[%s3 + $0x8] sm:$0xf]
    %v563 = vld [vmem:[%s3 + $0xc] sm:$0xf]
    %v564 = vld [vmem:[%s3 + $0x10] sm:$0xf]
    %v565 = vld [vmem:[%s3 + $0x14] sm:$0xf]
    %v566 = vld [vmem:[%s3 + $0x18] sm:$0xf]
    %v567 = vld [vmem:[%s3 + $0x1c] sm:$0xf]
    %v568 = vld [vmem:[%s3 + $0x20] sm:$0xf]
    %v569 = vld [vmem:[%s3 + $0x24] sm:$0xf]
    %v570 = vld [vmem:[%s3 + $0x28] sm:$0xf]
    %v571 = vld [vmem:[%s3 + $0x2c] sm:$0xf]
    %v572 = vld [vmem:[%s3 + $0x30] sm:$0xf]
    %v573 = vld [vmem:[%s3 + $0x34] sm:$0xf]
    %v574 = vld [vmem:[%s3 + $0x38] sm:$0xf]
    %v575 = vld [vmem:[%s3 + $0x3c] sm:$0xf]
    %v576 = vld [vmem:[%s4] sm:$0x1]
    %v578 = vlaneseq
    %v579 = vshrl.u32 %v578, 7
    %v580 = vsub.s32 0, %v579
    %v581 = vrot.slane %v576, %v580
    %v599 = vunpack.c.l.b16 %v560
    %v600 = vunpack.c.l.b16 %v561
    %v601 = vunpack.c.l.b16 %v562
    %v602 = vunpack.c.l.b16 %v563
    %v603 = vunpack.c.l.b16 %v564
    %v604 = vunpack.c.l.b16 %v565
    %v605 = vunpack.c.l.b16 %v566
    %v606 = vunpack.c.l.b16 %v567
    %v607 = vunpack.c.l.b16 %v568
    %v608 = vunpack.c.l.b16 %v569
    %v609 = vunpack.c.l.b16 %v570
    %v610 = vunpack.c.l.b16 %v571
    %v611 = vunpack.c.l.b16 %v572
    %v612 = vunpack.c.l.b16 %v573
    %v613 = vunpack.c.l.b16 %v574
    %v614 = vunpack.c.l.b16 %v575
    %v615 = vpack.c.b16 %v600, %v599
    %v616 = vpack.c.b16 %v602, %v601
    %v617 = vpack.c.b16 %v604, %v603
    %v618 = vpack.c.b16 %v606, %v605
    %v619 = vpack.c.b16 %v608, %v607
    %v620 = vpack.c.b16 %v610, %v609
    %v621 = vpack.c.b16 %v612, %v611
    %v622 = vpack.c.b16 %v614, %v613
    %631 = vmatprep.subr.bf16.mxu0 0
    %632 = vmatpush1.bf16.msra.mxu0 %v615
    %633 = vmatprep.subr.bf16.mxu0 0
    %634 = vmatpush1.bf16.msra.mxu0 %v616
    %635 = vmatprep.subr.bf16.mxu0 0
    %636 = vmatpush1.bf16.msra.mxu0 %v617
    %637 = vmatprep.subr.bf16.mxu0 0
    %638 = vmatpush1.bf16.msra.mxu0 %v618
    %639 = vmatprep.subr.bf16.mxu0 0
    %640 = vmatpush1.bf16.msra.mxu0 %v619
    %641 = vmatprep.subr.bf16.mxu0 0
    %642 = vmatpush1.bf16.msra.mxu0 %v620
    %643 = vmatprep.subr.bf16.mxu0 0
    %644 = vmatpush1.bf16.msra.mxu0 %v621
    %645 = vmatprep.subr.bf16.mxu0 0
    %646 = vmatpush1.bf16.msra.mxu0 %v622
    %647 = vmatprep.subr.bf16.mxu0 0
    %648 = vmatpush1.bf16.msra.mxu0 0
    %649 = vmatprep.subr.bf16.mxu0 0
    %650 = vmatpush1.bf16.msra.mxu0 0
    %651 = vmatprep.subr.bf16.mxu0 0
    %652 = vmatpush1.bf16.msra.mxu0 0
    %653 = vmatprep.subr.bf16.mxu0 0
    %654 = vmatpush1.bf16.msra.mxu0 0
    %655 = vmatprep.subr.bf16.mxu0 0
    %656 = vmatpush1.bf16.msra.mxu0 0
    %657 = vmatprep.subr.bf16.mxu0 0
    %658 = vmatpush1.bf16.msra.mxu0 0
    %659 = vmatprep.subr.bf16.mxu0 0
    %660 = vmatpush1.bf16.msra.mxu0 0
    %661 = vmatprep.subr.bf16.mxu0 0
    %662 = vmatpush1.bf16.msra.mxu0 0
    %663 = vmatprep.mubr.bf16.mxu0 0
    %664 = vmatmul.mubr.bf16.gmra.mrb[0].mxu0 %v559
    %v665 = vpop.f32.mrb[0].mxu0
    %v666 = vadd.f32 %v581, %v665
    %v667 = vpop.f32.mrb[0].mxu0
    %v668 = vpop.f32.mrb[0].mxu0
    %v669 = vpop.f32.mrb[0].mxu0
    %670 = vdwg.mxu0
    %v671 = vmax.f32 %v666, 0.0
    %v672 = vpack.c.bf16 %v671, %v671
    %v673 = vld [vmem:[#allocation7] sm:$0xf]
    %v674 = vld [vmem:[#allocation7 + $0x4] sm:$0xf]
    %v675 = vld [vmem:[#allocation7 + $0x8] sm:$0xf]
    %v676 = vld [vmem:[#allocation7 + $0xc] sm:$0xf]
    %v677 = vld [vmem:[#allocation7 + $0x10] sm:$0xf]
    %v678 = vld [vmem:[#allocation7 + $0x14] sm:$0xf]
    %v679 = vld [vmem:[#allocation7 + $0x18] sm:$0xf]
    %v680 = vld [vmem:[#allocation7 + $0x1c] sm:$0xf]
    %v681 = vld [vmem:[#allocation7 + $0x20] sm:$0xf]
    %v682 = vld [vmem:[#allocation7 + $0x24] sm:$0xf]
    %v683 = vld [vmem:[#allocation7 + $0x28] sm:$0xf]
    %v684 = vld [vmem:[#allocation7 + $0x2c] sm:$0xf]
    %v685 = vld [vmem:[#allocation7 + $0x30] sm:$0xf]
    %v686 = vld [vmem:[#allocation7 + $0x34] sm:$0xf]
    %v687 = vld [vmem:[#allocation7 + $0x38] sm:$0xf]
    %v688 = vld [vmem:[#allocation7 + $0x3c] sm:$0xf]
    %v689 = vld [vmem:[%s6] sm:$0x1]
    %v691 = vlaneseq
    %v692 = vshrl.u32 %v691, 7
    %v693 = vsub.s32 0, %v692
    %v694 = vrot.slane %v689, %v693
    %v712 = vunpack.c.l.b16 %v673
    %v713 = vunpack.c.l.b16 %v674
    %v714 = vunpack.c.l.b16 %v675
    %v715 = vunpack.c.l.b16 %v676
    %v716 = vunpack.c.l.b16 %v677
    %v717 = vunpack.c.l.b16 %v678
    %v718 = vunpack.c.l.b16 %v679
    %v719 = vunpack.c.l.b16 %v680
    %v720 = vunpack.c.l.b16 %v681
    %v721 = vunpack.c.l.b16 %v682
    %v722 = vunpack.c.l.b16 %v683
    %v723 = vunpack.c.l.b16 %v684
    %v724 = vunpack.c.l.b16 %v685
    %v725 = vunpack.c.l.b16 %v686
    %v726 = vunpack.c.l.b16 %v687
    %v727 = vunpack.c.l.b16 %v688
    %v728 = vpack.c.b16 %v713, %v712
    %v729 = vpack.c.b16 %v715, %v714
    %v730 = vpack.c.b16 %v717, %v716
    %v731 = vpack.c.b16 %v719, %v718
    %v732 = vpack.c.b16 %v721, %v720
    %v733 = vpack.c.b16 %v723, %v722
    %v734 = vpack.c.b16 %v725, %v724
    %v735 = vpack.c.b16 %v727, %v726
    %744 = vmatprep.subr.bf16.mxu0 0
    %745 = vmatpush1.bf16.msra.mxu0 %v728
    %746 = vmatprep.subr.bf16.mxu0 0
    %747 = vmatpush1.bf16.msra.mxu0 %v729
    %748 = vmatprep.subr.bf16.mxu0 0
    %749 = vmatpush1.bf16.msra.mxu0 %v730
    %750 = vmatprep.subr.bf16.mxu0 0
    %751 = vmatpush1.bf16.msra.mxu0 %v731
    %752 = vmatprep.subr.bf16.mxu0 0
    %753 = vmatpush1.bf16.msra.mxu0 %v732
    %754 = vmatprep.subr.bf16.mxu0 0
    %755 = vmatpush1.bf16.msra.mxu0 %v733
    %756 = vmatprep.subr.bf16.mxu0 0
    %757 = vmatpush1.bf16.msra.mxu0 %v734
    %758 = vmatprep.subr.bf16.mxu0 0
    %759 = vmatpush1.bf16.msra.mxu0 %v735
    %760 = vmatprep.subr.bf16.mxu0 0
    %761 = vmatpush1.bf16.msra.mxu0 0
    %762 = vmatprep.subr.bf16.mxu0 0
    %763 = vmatpush1.bf16.msra.mxu0 0
    %764 = vmatprep.subr.bf16.mxu0 0
    %765 = vmatpush1.bf16.msra.mxu0 0
    %766 = vmatprep.subr.bf16.mxu0 0
    %767 = vmatpush1.bf16.msra.mxu0 0
    %768 = vmatprep.subr.bf16.mxu0 0
    %769 = vmatpush1.bf16.msra.mxu0 0
    %770 = vmatprep.subr.bf16.mxu0 0
    %771 = vmatpush1.bf16.msra.mxu0 0
    %772 = vmatprep.subr.bf16.mxu0 0
    %773 = vmatpush1.bf16.msra.mxu0 0
    %774 = vmatprep.subr.bf16.mxu0 0
    %775 = vmatpush1.bf16.msra.mxu0 0
    %776 = vmatprep.mubr.bf16.mxu0 0
    %777 = vmatmul.mubr.bf16.gmra.mrb[0].mxu0 %v672
    %v778 = vpop.f32.mrb[0].mxu0
    %v779 = vadd.f32 %v694, %v778
    %v780 = vpop.f32.mrb[0].mxu0
    %v781 = vpop.f32.mrb[0].mxu0
    %v782 = vpop.f32.mrb[0].mxu0
    %783 = vdwg.mxu0
    %v784 = vmax.f32 %v779, 0.0
    %v785 = vpack.c.bf16 %v784, %v784
    %v786 = vld [vmem:[%s7] sm:$0xf]
    %v787 = vld [vmem:[%s7 + $0x4] sm:$0xf]
    %v788 = vld [vmem:[%s7 + $0x8] sm:$0xf]
    %v789 = vld [vmem:[%s7 + $0xc] sm:$0xf]
    %v790 = vld [vmem:[%s7 + $0x10] sm:$0xf]
    %v791 = vld [vmem:[%s7 + $0x14] sm:$0xf]
    %v792 = vld [vmem:[%s7 + $0x18] sm:$0xf]
    %v793 = vld [vmem:[%s7 + $0x1c] sm:$0xf]
    %v794 = vld [vmem:[%s7 + $0x20] sm:$0xf]
    %v795 = vld [vmem:[%s7 + $0x24] sm:$0xf]
    %v796 = vld [vmem:[%s7 + $0x28] sm:$0xf]
    %v797 = vld [vmem:[%s7 + $0x2c] sm:$0xf]
    %v798 = vld [vmem:[%s7 + $0x30] sm:$0xf]
    %v799 = vld [vmem:[%s7 + $0x34] sm:$0xf]
    %v800 = vld [vmem:[%s7 + $0x38] sm:$0xf]
    %v801 = vld [vmem:[%s7 + $0x3c] sm:$0xf]
    %v802 = vld [vmem:[%s8] sm:$0x1]
    %v804 = vlaneseq
    %v805 = vshrl.u32 %v804, 7
    %v806 = vsub.s32 0, %v805
    %v807 = vrot.slane %v802, %v806
    %v825 = vunpack.c.l.b16 %v786
    %v826 = vunpack.c.l.b16 %v787
    %v827 = vunpack.c.l.b16 %v788
    %v828 = vunpack.c.l.b16 %v789
    %v829 = vunpack.c.l.b16 %v790
    %v830 = vunpack.c.l.b16 %v791
    %v831 = vunpack.c.l.b16 %v792
    %v832 = vunpack.c.l.b16 %v793
    %v833 = vunpack.c.l.b16 %v794
    %v834 = vunpack.c.l.b16 %v795
    %v835 = vunpack.c.l.b16 %v796
    %v836 = vunpack.c.l.b16 %v797
    %v837 = vunpack.c.l.b16 %v798
    %v838 = vunpack.c.l.b16 %v799
    %v839 = vunpack.c.l.b16 %v800
    %v840 = vunpack.c.l.b16 %v801
    %v841 = vpack.c.b16 %v826, %v825
    %v842 = vpack.c.b16 %v828, %v827
    %v843 = vpack.c.b16 %v830, %v829
    %v844 = vpack.c.b16 %v832, %v831
    %v845 = vpack.c.b16 %v834, %v833
    %v846 = vpack.c.b16 %v836, %v835
    %v847 = vpack.c.b16 %v838, %v837
    %v848 = vpack.c.b16 %v840, %v839
    %857 = vmatprep.subr.bf16.mxu0 0
    %858 = vmatpush1.bf16.msra.mxu0 %v841
    %859 = vmatprep.subr.bf16.mxu0 0
    %860 = vmatpush1.bf16.msra.mxu0 %v842
    %861 = vmatprep.subr.bf16.mxu0 0
    %862 = vmatpush1.bf16.msra.mxu0 %v843
    %863 = vmatprep.subr.bf16.mxu0 0
    %864 = vmatpush1.bf16.msra.mxu0 %v844
    %865 = vmatprep.subr.bf16.mxu0 0
    %866 = vmatpush1.bf16.msra.mxu0 %v845
    %867 = vmatprep.subr.bf16.mxu0 0
    %868 = vmatpush1.bf16.msra.mxu0 %v846
    %869 = vmatprep.subr.bf16.mxu0 0
    %870 = vmatpush1.bf16.msra.mxu0 %v847
    %871 = vmatprep.subr.bf16.mxu0 0
    %872 = vmatpush1.bf16.msra.mxu0 %v848
    %873 = vmatprep.subr.bf16.mxu0 0
    %874 = vmatpush1.bf16.msra.mxu0 0
    %875 = vmatprep.subr.bf16.mxu0 0
    %876 = vmatpush1.bf16.msra.mxu0 0
    %877 = vmatprep.subr.bf16.mxu0 0
    %878 = vmatpush1.bf16.msra.mxu0 0
    %879 = vmatprep.subr.bf16.mxu0 0
    %880 = vmatpush1.bf16.msra.mxu0 0
    %881 = vmatprep.subr.bf16.mxu0 0
    %882 = vmatpush1.bf16.msra.mxu0 0
    %883 = vmatprep.subr.bf16.mxu0 0
    %884 = vmatpush1.bf16.msra.mxu0 0
    %885 = vmatprep.subr.bf16.mxu0 0
    %886 = vmatpush1.bf16.msra.mxu0 0
    %887 = vmatprep.subr.bf16.mxu0 0
    %888 = vmatpush1.bf16.msra.mxu0 0
    %889 = vmatprep.mubr.bf16.mxu0 0
    %890 = vmatmul.mubr.bf16.gmra.mrb[0].mxu0 %v785
    %v891 = vpop.f32.mrb[0].mxu0
    %v892 = vadd.f32 %v807, %v891
    %v893 = vpop.f32.mrb[0].mxu0
    %v894 = vpop.f32.mrb[0].mxu0
    %v895 = vpop.f32.mrb[0].mxu0
    %896 = vdwg.mxu0
    %v897 = vmax.f32 %v892, 0.0
    %vm898 = vcmask 64512
    %899 = vst.msk [vmem:[#allocation8] sm:$0xff] %vm898, %v897
    // Predicated region
    $region50: #{tpu_custom_call.1} parent=1 // pred_check
      _
    $region51: #{tpu_custom_call.1} parent=1 // pred_check_branch
      %901 = sbr.rel (0) target = $region53
    $region52: #{tpu_custom_call.1} parent=1 // pred_region
      %s903 = ssub.s32 128, 128
      %904 = vsyncadd [#allocation4], %s903
      %s906 = sshll.u32 [#allocation8], 4
      %s907 = int_to_ptr.vmem [resolvable:$true] %s906
      %909 = dma.vmem_to_hbm [thread:$0]  %s907, 128, %s9, [#allocation4]
    $region53: #{tpu_custom_call.1} parent=1 // pred_fallthru
      _
    // Predicated region
    $region54: #{tpu_custom_call.1} parent=1 // pred_check
      _
    $region55: #{tpu_custom_call.1} parent=1 // pred_check_branch
      %911 = sbr.rel (0) target = $region57
    $region56: #{tpu_custom_call.1} parent=1 // pred_region
      %912 = dma.done [#allocation4], 128
    $region57: #{tpu_custom_call.1} parent=1 // pred_fallthru
      _
    %913 = vsyncpa [#allocation3], 1
    %914 = vsyncpa [#allocation6], 1
    %915 = vsyncpa [#allocation4], 1

</llo_original>
